<compile_context>
chip_gen: v6e
topology: v6e:2x2x1
jax: 0.10.0
libtpu: 0.0.40
codegen_flags: <defaults>
</compile_context>

<pallas_src>
import functools
import math

import jax
import jax.numpy as jnp
from jax.experimental import pallas as pl
from jax.experimental.pallas import tpu as pltpu


def _n_bisect_iters(dtype):
    """Bisection depth: interval starts < 1 wide, so 2^-n tau resolution."""
    # bf16/fp16 I/O: resolving tau past ~1e-4 is invisible in the output.
    return 16 if jnp.dtype(dtype).itemsize < 4 else 20


# ----------------------------------------------------------------------------
# entmax-1.5 (alpha = 1.5 Tsallis entmax) along the last axis, in-kernel.
# ----------------------------------------------------------------------------
def _entmax15_halved(x, n_iters):
    """entmax-1.5 via bisection; `x` is already scaled by (alpha-1)=0.5.

    Returns (p_unnormalized, inv_row_sum) so the caller can fold the 1/sum
    normalization into the small (TQ, Dv) output instead of the (TQ, Lk) slab.
    """
    n = x.shape[-1]
    tau_lo = jnp.max(x, axis=-1, keepdims=True) - 1.0   # gp_inv(1, 1.5) = 1
    # tau_hi - tau_lo = 1 - sqrt(1/n): data-independent scalar, width < 1.
    dm = jnp.float32(1.0 - (1.0 / n) ** 0.5)

    def body(_, carry):
        tau_lo_c, dm_c = carry
        dm_c = dm_c * 0.5
        tau_m = tau_lo_c + dm_c
        u = jnp.maximum(x - tau_m, 0.0)
        p_m = u * u
        # Exact f32 cross-lane reduce on the VPU/XLU (replaces the MXU
        # ones-matmul reduce: far fewer MACs, no bf16-pass rounding of f_m).
        f_m = jnp.sum(p_m, axis=-1, keepdims=True)
        # f_lo >= 0 always, so the original `f_m * f_lo >= 0` test is `f_m >= 1`.
        tau_lo_c = jnp.where(f_m >= 1.0, tau_m, tau_lo_c)
        # Only the (TQ, 1) bracket is carried -> no per-iteration slab writeback.
        return (tau_lo_c, dm_c)

    tau_lo, dm = jax.lax.fori_loop(0, n_iters, body, (tau_lo, dm))

    # One extra slab pass: rebuild p from the final bracket midpoint.
    u = jnp.maximum(x - (tau_lo + 0.5 * dm), 0.0)
    p = u * u

    # ensure_sum_one: exact row-sum, EUP approx reciprocal refined by a single
    # Newton step on the tiny (TQ, 1) tensor; caller multiplies the output.
    s = jnp.sum(p, axis=-1, keepdims=True)
    inv = pl.reciprocal(s, approx=True)
    inv = inv * (2.0 - s * inv)
    return p, inv


# ----------------------------------------------------------------------------
# Kernel: one (TQ, D) query tile against the full (Lk, D)/(Lk, Dv) keys/values.
# ----------------------------------------------------------------------------
def _sdpa_entmax15_kernel(q_ref, k_ref, v_ref, o_ref, *, n_iters):
    q = q_ref[0]                                  # (TQ, D)   native dtype
    k = k_ref[0]                                  # (Lk, D)   native dtype
    v = v_ref[0]                                  # (Lk, Dv)  native dtype

    d = q.shape[-1]
    # q @ k^T without materializing a transpose: contract last dims of q and k.
    scores = jax.lax.dot_general(q, k,
                                 dimension_numbers=(((1,), (1,)), ((), ())),
                                 preferred_element_type=jnp.float32)
    # Fold 1/sqrt(d) and the entmax (alpha-1)=0.5 factor into a single scale.
    x = scores * jnp.float32(0.5 / math.sqrt(d))
    # TODO(synk): optional bf16 score slab for the bisection on v6e/v7x (halves
    # VMEM / vld traffic); kept f32 for generation-independent accuracy.

    # TODO(synk): optional `mask` argument (masked_fill with -1e12) is not
    # plumbed through; the module is exercised with mask=None (and dropout=None
    # is Identity, so there is nothing to translate for it).
    p, inv = _entmax15_halved(x, n_iters)         # unnormalized weights, 1/rowsum

    out = jax.lax.dot_general(p.astype(v.dtype), v,
                              dimension_numbers=(((1,), (0,)), ((), ())),
                              preferred_element_type=jnp.float32)
    # Normalization folded into the (TQ, Dv) result, not the (TQ, Lk) slab.
    o_ref[0] = (out * inv).astype(o_ref.dtype)


# ----------------------------------------------------------------------------
# Tiling / VMEM sizing helpers (per chip generation).
# ----------------------------------------------------------------------------
def _device_kind():
    try:
        return jax.devices()[0].device_kind.lower()
    except Exception:
        return ""


def _vmem_capacity_bytes():
    """Physical VMEM per TensorCore: v5e/v6e 128 MiB, v7x (and unknown) 64 MiB."""
    kind = _device_kind()
    if "v5" in kind or "v6" in kind:
        return 128 * 1024 * 1024
    return 64 * 1024 * 1024


def _sublane_multiple(dtype):
    """Row granule for the query tile: 8 (f32), 16 (bf16/fp16), 32 (8-bit)."""
    return max(8, 32 // jnp.dtype(dtype).itemsize)


def _pick_query_tile(Lq, Lk, vmem_cap, tq_cap, sub):
    """Largest TQ whose (TQ, Lk) f32 bisection temporaries fit comfortably."""
    budget = min(vmem_cap // 2, 48 * 1024 * 1024)
    per_row = 5 * Lk * 4                          # ~live f32 (TQ, Lk) buffers
    tq = max(sub, min(budget // per_row, tq_cap, Lq))
    if tq >= Lq:
        return Lq                                 # full-extent tile: any size ok
    tq = (tq // 128) * 128 if tq >= 128 else (tq // sub) * sub
    return max(sub, tq)


# ----------------------------------------------------------------------------
# Public wrapper.
# ----------------------------------------------------------------------------
@jax.jit
def scaled_dot_product_attention_entmax15(q, k, v):
    """q: (..., Lq, D), k: (..., Lk, D), v: (..., Lk, Dv) -> (..., Lq, Dv)."""
    lead = q.shape[:-2]
    Lq, D = q.shape[-2:]
    Lk = k.shape[-2]
    Dv = v.shape[-1]
    bh = math.prod(lead)

    qf = q.reshape(bh, Lq, D)
    kf = k.reshape(bh, Lk, D)
    vf = v.reshape(bh, Lk, Dv)

    kind = _device_kind()
    vmem_cap = _vmem_capacity_bytes()
    tq_cap = 128 if "v5" in kind else 256         # v5e MXU is 128-wide
    sub = _sublane_multiple(q.dtype)
    TQ = _pick_query_tile(Lq, Lk, vmem_cap, tq_cap, sub)
    nq = pl.cdiv(Lq, TQ)
    n_iters = _n_bisect_iters(q.dtype)

    esize = q.dtype.itemsize
    # double-buffered streamed blocks + f32 bisection temporaries.
    io_bytes = 2 * esize * (TQ * D + Lk * D + Lk * Dv + TQ * Dv)
    tmp_bytes = 4 * (5 * TQ * Lk + 16 * TQ)
    # v7x-class 64 MiB parts: cap at 48 MiB to leave Mosaic-scratch headroom;
    # 128 MiB parts keep the 0.85 * capacity cap.
    hard_cap = (48 * 1024 * 1024 if vmem_cap <= 64 * 1024 * 1024
                else int(0.85 * vmem_cap))
    vmem_limit = int(min(max(int(1.4 * (io_bytes + tmp_bytes)) + (2 << 20),
                             32 << 20),
                         hard_cap))

    kernel = functools.partial(_sdpa_entmax15_kernel, n_iters=n_iters)

    # TODO(synk): for Dv < 128 the output writeback uses lane-sparse (masked)
    # stores; packing ceil(128/Dv) heads per grid step would make it lane-dense
    # at the cost of an in-kernel relayout — skipped since the bisection loop
    # still dominates the kernel.
    out = pl.pallas_call(
        kernel,
        out_shape=jax.ShapeDtypeStruct((bh, Lq, Dv), q.dtype),
        grid=(bh, nq),
        in_specs=[
            pl.BlockSpec((1, TQ, D), lambda b, i: (b, i, 0)),
            pl.BlockSpec((1, Lk, D), lambda b, i: (b, 0, 0)),    # full keys resident
            pl.BlockSpec((1, Lk, Dv), lambda b, i: (b, 0, 0)),   # full values resident
        ],
        out_specs=pl.BlockSpec((1, TQ, Dv), lambda b, i: (b, i, 0)),
        compiler_params=pltpu.CompilerParams(
            # Both grid axes are independent -> the megacore split can land on
            # bh (preferred: each core keeps its own K/V resident) or on nq
            # when bh is small, so both v7x TensorCores stay busy.
            dimension_semantics=("parallel", "parallel"),
            vmem_limit_bytes=vmem_limit,
        ),
    )(qf, kf, vf)

    return out.reshape(*lead, Lq, Dv)


# ----------------------------------------------------------------------------
# Pure-JAX reference (same bisection algorithm) for correctness checking.
# ----------------------------------------------------------------------------
def _entmax15_ref(scores, n_iters):
    x = scores * 0.5
    n = scores.shape[-1]
    tau_lo = jnp.max(x, axis=-1, keepdims=True) - 1.0
    dm = jnp.float32(1.0 - (1.0 / n) ** 0.5)

    def body(_, carry):
        tau_lo_c, dm_c = carry
        dm_c = dm_c * 0.5
        tau_m = tau_lo_c + dm_c
        p_m = jnp.square(jnp.maximum(x - tau_m, 0.0))
        f_m = jnp.sum(p_m, axis=-1, keepdims=True)
        tau_lo_c = jnp.where(f_m >= 1.0, tau_m, tau_lo_c)
        return (tau_lo_c, dm_c)

    tau_lo, dm = jax.lax.fori_loop(0, n_iters, body, (tau_lo, dm))
    p = jnp.square(jnp.maximum(x - (tau_lo + 0.5 * dm), 0.0))
    return p / jnp.sum(p, axis=-1, keepdims=True)


def _reference(q, k, v, n_iters):
    d = q.shape[-1]
    scores = jnp.einsum("...qd,...kd->...qk", q, k) / math.sqrt(d)
    attn = _entmax15_ref(scores, n_iters)
    return jnp.einsum("...qk,...kd->...qd", attn, v)


if __name__ == "__main__":
    key = jax.random.PRNGKey(0)
    kq, kk, kv = jax.random.split(key, 3)

    B, H, S, D = 2, 2, 16, 32
    q = jax.random.normal(kq, (B, H, S, D), dtype=jnp.float32)
    k = jax.random.normal(kk, (B, H, S, D), dtype=jnp.float32)
    v = jax.random.normal(kv, (B, H, S, D), dtype=jnp.float32)

    out = jax.block_until_ready(scaled_dot_product_attention_entmax15(q, k, v))
    ref = jax.block_until_ready(_reference(q, k, v, _n_bisect_iters(jnp.float32)))
    assert out.shape == (B, H, S, D)
    err = float(jnp.max(jnp.abs(out - ref)))
    # Tolerance covers MXU operand rounding in the q@k^T matmul on generations
    # that run f32 matmuls as bf16 passes (the bisection reduce is now exact).
    assert err < 5e-3, f"f32 max abs err {err}"

    # Native-bf16 path: streamed tensors stay bf16 (half the HBM traffic,
    # native MXU rate); accumulation and the entmax bisection remain f32.
    qb, kb, vb = (t.astype(jnp.bfloat16) for t in (q, k, v))
    outb = jax.block_until_ready(scaled_dot_product_attention_entmax15(qb, kb, vb))
    assert outb.shape == (B, H, S, D) and outb.dtype == jnp.bfloat16
    errb = float(jnp.max(jnp.abs(outb.astype(jnp.float32) - ref)))
    assert errb < 1.5e-1, f"bf16 max abs err {errb}"

    print("KERNEL_OK")
</pallas_src>

<mosaic_0001>
module attributes {stable_mosaic.version = 11 : i64} {
  func.func @_sdpa_entmax15_kernel(%arg0: i32, %arg1: i32, %arg2: memref<1x16x32xf32, #tpu.memory_space<vmem>>, %arg3: memref<1x16x32xf32, #tpu.memory_space<vmem>>, %arg4: memref<1x16x32xf32, #tpu.memory_space<vmem>>, %arg5: memref<1x16x32xf32, #tpu.memory_space<vmem>>) attributes {dimension_semantics = [#tpu.dimension_semantics<parallel>, #tpu.dimension_semantics<parallel>], iteration_bounds = array<i64: 4, 1>, scalar_prefetch = 0 : i64, scratch_operands = 0 : i64, tpu.core_type = #tpu.core_type<tc>, window_params = [{transform_indices = @transform_0, window_bounds = array<i64: 1, 16, 32>}, {transform_indices = @transform_1, window_bounds = array<i64: 1, 16, 32>}, {transform_indices = @transform_2, window_bounds = array<i64: 1, 16, 32>}, {transform_indices = @transform_3, window_bounds = array<i64: 1, 16, 32>}]} {
    %c0 = arith.constant 0 : index
    %c0_0 = arith.constant 0 : index
    %c0_1 = arith.constant 0 : index
    %0 = vector.load %arg2[%c0, %c0_0, %c0_1] : memref<1x16x32xf32, #tpu.memory_space<vmem>>, vector<1x16x32xf32>
    %1 = vector.shape_cast %0 : vector<1x16x32xf32> to vector<16x32xf32>
    %c0_2 = arith.constant 0 : index
    %c0_3 = arith.constant 0 : index
    %c0_4 = arith.constant 0 : index
    %2 = vector.load %arg3[%c0_2, %c0_3, %c0_4] : memref<1x16x32xf32, #tpu.memory_space<vmem>>, vector<1x16x32xf32>
    %3 = vector.shape_cast %2 : vector<1x16x32xf32> to vector<16x32xf32>
    %c0_5 = arith.constant 0 : index
    %c0_6 = arith.constant 0 : index
    %c0_7 = arith.constant 0 : index
    %4 = vector.load %arg4[%c0_5, %c0_6, %c0_7] : memref<1x16x32xf32, #tpu.memory_space<vmem>>, vector<1x16x32xf32>
    %5 = vector.shape_cast %4 : vector<1x16x32xf32> to vector<16x32xf32>
    %cst = arith.constant dense<0.000000e+00> : vector<16x16xf32>
    %6 = tpu.matmul %1, %3, %cst {dimension_numbers = #tpu.dot_dimension_numbers<[1], [1], [0], [0], [0, 0, 1, 0], [], []>} : vector<16x32xf32>, vector<16x32xf32>, vector<16x16xf32> -> vector<16x16xf32>
    %cst_8 = arith.constant 0.0883883461 : f32
    %7 = vector.broadcast %cst_8 : f32 to vector<16x16xf32>
    %8 = arith.mulf %6, %7 : vector<16x16xf32>
    %cst_9 = arith.constant dense<0xFF800000> : vector<16xf32>
    %9 = vector.multi_reduction <maximumf>, %8, %cst_9 [1] : vector<16x16xf32> to vector<16xf32>
    %10 = vector.shape_cast %9 : vector<16xf32> to vector<16x1xf32>
    %cst_10 = arith.constant 1.000000e+00 : f32
    %11 = vector.broadcast %cst_10 : f32 to vector<16x1xf32>
    %12 = arith.subf %10, %11 : vector<16x1xf32>
    %cst_11 = arith.constant 7.500000e-01 : f32
    %c0_i32 = arith.constant 0 : i32
    %c20_i32 = arith.constant 20 : i32
    %13 = arith.addi %c0_i32, %c20_i32 : i32
    %c1_i32 = arith.constant 1 : i32
    %14:2 = scf.for %arg6 = %c0_i32 to %13 step %c1_i32 iter_args(%arg7 = %12, %arg8 = %cst_11) -> (vector<16x1xf32>, f32)  : i32 {
      %cst_20 = arith.constant 5.000000e-01 : f32
      %36 = arith.mulf %arg8, %cst_20 : f32
      %37 = vector.broadcast %36 : f32 to vector<16x1xf32>
      %38 = arith.addf %arg7, %37 : vector<16x1xf32>
      %39 = vector.broadcast %38 : vector<16x1xf32> to vector<16x16xf32>
      %40 = arith.subf %8, %39 : vector<16x16xf32>
      %cst_21 = arith.constant 0.000000e+00 : f32
      %41 = vector.broadcast %cst_21 : f32 to vector<16x16xf32>
      %42 = arith.maximumf %40, %41 : vector<16x16xf32>
      %43 = arith.mulf %42, %42 : vector<16x16xf32>
      %cst_22 = arith.constant dense<0.000000e+00> : vector<16xf32>
      %44 = vector.multi_reduction <add>, %43, %cst_22 [1] : vector<16x16xf32> to vector<16xf32>
      %45 = vector.shape_cast %44 : vector<16xf32> to vector<16x1xf32>
      %cst_23 = arith.constant 1.000000e+00 : f32
      %46 = vector.broadcast %cst_23 : f32 to vector<16x1xf32>
      %47 = arith.cmpf oge, %45, %46 : vector<16x1xf32>
      %48 = arith.select %47, %38, %arg7 : vector<16x1xi1>, vector<16x1xf32>
      scf.yield %48, %36 : vector<16x1xf32>, f32
    }
    %cst_12 = arith.constant 5.000000e-01 : f32
    %15 = arith.mulf %cst_12, %14#1 : f32
    %16 = vector.broadcast %15 : f32 to vector<16x1xf32>
    %17 = arith.addf %14#0, %16 : vector<16x1xf32>
    %18 = vector.broadcast %17 : vector<16x1xf32> to vector<16x16xf32>
    %19 = arith.subf %8, %18 : vector<16x16xf32>
    %cst_13 = arith.constant 0.000000e+00 : f32
    %20 = vector.broadcast %cst_13 : f32 to vector<16x16xf32>
    %21 = arith.maximumf %19, %20 : vector<16x16xf32>
    %22 = arith.mulf %21, %21 : vector<16x16xf32>
    %cst_14 = arith.constant dense<0.000000e+00> : vector<16xf32>
    %23 = vector.multi_reduction <add>, %22, %cst_14 [1] : vector<16x16xf32> to vector<16xf32>
    %24 = vector.shape_cast %23 : vector<16xf32> to vector<16x1xf32>
    %25 = tpu.reciprocal %24 {approx = true} : vector<16x1xf32> -> vector<16x1xf32>
    %26 = arith.mulf %24, %25 : vector<16x1xf32>
    %cst_15 = arith.constant 2.000000e+00 : f32
    %27 = vector.broadcast %cst_15 : f32 to vector<16x1xf32>
    %28 = arith.subf %27, %26 : vector<16x1xf32>
    %29 = arith.mulf %25, %28 : vector<16x1xf32>
    %cst_16 = arith.constant dense<0.000000e+00> : vector<16x32xf32>
    %30 = tpu.matmul %22, %5, %cst_16 {dimension_numbers = #tpu.dot_dimension_numbers<[1], [0], [0], [1], [0, 0, 1, 1], [], []>} : vector<16x16xf32>, vector<16x32xf32>, vector<16x32xf32> -> vector<16x32xf32>
    %31 = vector.broadcast %29 : vector<16x1xf32> to vector<16x32xf32>
    %32 = arith.mulf %30, %31 : vector<16x32xf32>
    %c0_17 = arith.constant 0 : index
    %c0_18 = arith.constant 0 : index
    %c0_19 = arith.constant 0 : index
    %33 = vector.load %arg5[%c0_17, %c0_18, %c0_19] : memref<1x16x32xf32, #tpu.memory_space<vmem>>, vector<1x16x32xf32>
    %34 = vector.shape_cast %33 : vector<1x16x32xf32> to vector<16x32xf32>
    %35 = vector.shape_cast %32 : vector<16x32xf32> to vector<1x16x32xf32>
    tpu.vector_store %arg5[%c0_17, %c0_18, %c0_19], %35 {strides = array<i32>} : memref<1x16x32xf32, #tpu.memory_space<vmem>>, vector<1x16x32xf32>,
    return
  }
  func.func @transform_0(%arg0: i32, %arg1: i32) -> (i32, i32, i32) {
    %c0_i32 = arith.constant 0 : i32
    %c0_i32_0 = arith.constant 0 : i32
    return %arg0, %arg1, %c0_i32 : i32, i32, i32
  }
  func.func @transform_1(%arg0: i32, %arg1: i32) -> (i32, i32, i32) {
    %c0_i32 = arith.constant 0 : i32
    %c0_i32_0 = arith.constant 0 : i32
    %c0_i32_1 = arith.constant 0 : i32
    return %arg0, %c0_i32, %c0_i32_0 : i32, i32, i32
  }
  func.func @transform_2(%arg0: i32, %arg1: i32) -> (i32, i32, i32) {
    %c0_i32 = arith.constant 0 : i32
    %c0_i32_0 = arith.constant 0 : i32
    %c0_i32_1 = arith.constant 0 : i32
    return %arg0, %c0_i32, %c0_i32_0 : i32, i32, i32
  }
  func.func @transform_3(%arg0: i32, %arg1: i32) -> (i32, i32, i32) {
    %c0_i32 = arith.constant 0 : i32
    %c0_i32_0 = arith.constant 0 : i32
    return %arg0, %arg1, %c0_i32 : i32, i32, i32
  }
}

</mosaic_0001>

<llo_original>
// kernel: scaled_dot_product_attention_entmax15.1
$region0: #{scaled_dot_product_attention_entmax15.1}
  #allocation0 [shape = 'u32[]', space=smem, size = 0x4, offset = 0x4, fixed_abs, tag = 'smem constant byte address 0x4 - core index']
  #allocation1 [shape = 'u32[144,128]{1,0:T(1,128)}', space=vmem, size = 0x12000, scoped, tag = 'internal scratch']
  %s0 = inlined_call_operand.hbm [shape: f32[4,16,32], index: 0, kind: input, shape index: {}]
  %s1 = inlined_call_operand.hbm [shape: f32[4,16,32], index: 1, kind: input, shape index: {}]
  %s2 = inlined_call_operand.hbm [shape: f32[4,16,32], index: 2, kind: input, shape index: {}]
  %s3 = inlined_call_operand.hbm [shape: f32[4,16,32], index: 3, kind: output, shape index: {}]
  %s4 = sld [smem:[#allocation0]]
  $region64: #{scaled_dot_product_attention_entmax15.1} parent=0
    _
  %s6 = ssub.s32 1, %s4
  %s7 = scalar_select 0, %s6, %s4
  $region1: #{scaled_dot_product_attention_entmax15.1} parent=0
    #allocation2 [shape = 'u8[16384]{0}', space=vmem, size = 0x4000, scoped, tag = 'input window, operand 0']
    #allocation3 [shape = 's32[2]{0}', space=sflag, size = 0x8, scoped, tag = 'scoped memory for scaled_dot_product_attention_entmax15.1']
    #allocation4 [shape = 's32[2]{0}', space=sflag, size = 0x8, scoped, tag = 'scoped memory for scaled_dot_product_attention_entmax15.1']
    #allocation5 [shape = 'u8[16384]{0}', space=vmem, size = 0x4000, scoped, tag = 'input window, operand 1']
    #allocation6 [shape = 's32[2]{0}', space=sflag, size = 0x8, scoped, tag = 'scoped memory for scaled_dot_product_attention_entmax15.1']
    #allocation7 [shape = 'u8[16384]{0}', space=vmem, size = 0x4000, scoped, tag = 'input window, operand 2']
    #allocation8 [shape = 'u8[16384]{0}', space=vmem, size = 0x4000, scoped, tag = 'output window, operand 0']
    %8 = vsyncpa [#allocation3], 0
    %s9 = scalar_lea.sflag [#allocation3], 1
    %10 = vsyncpa %s9, 0
    %11 = vsyncpa [#allocation6], 0
    %s12 = scalar_lea.sflag [#allocation6], 1
    %13 = vsyncpa %s12, 0
    %14 = vsyncpa [#allocation4], 0
    %s15 = scalar_lea.sflag [#allocation4], 1
    %16 = vsyncpa %s15, 0
    loop: start=0, step=1, limit=6
    $region2: #{scaled_dot_product_attention_entmax15.1} parent=1 // loop_pre_header
      _
    $region3: #{scaled_dot_product_attention_entmax15.1} parent=1 // loop_header
      %s18 = sphi 0, %s22
      %p19 = scmp.ge.s32.totalorder %s18, 6
      %s25 = sphi 0, %s37
      %s26 = sphi 0, %s33
      %s27 = sphi 0, %s25
      %s28 = sphi 0, %s26
      %s29 = sphi 0, %s27
      %s30 = sphi 0, %s28
      %s42 = sphi 0, %s44
      %s45 = sphi 0, %s42
      %s46 = sphi 0, %s45
      %s62 = sphi 0, %s46
      %s68 = sphi 0, %s70
      %s71 = sphi 0, %s68
      %s72 = sphi 0, %s71
      %s88 = sphi 0, %s72
      %s94 = sphi 0, %s96
      %s97 = sphi 0, %s94
      %s98 = sphi 0, %s97
      %s114 = sphi 0, %s98
      %s122 = sphi 0, %s124
      %s125 = sphi 0, %s122
      %s126 = sphi 0, %s125
      %s142 = sphi 0, %s126
    $region4: #{scaled_dot_product_attention_entmax15.1} parent=1 // loop_header_branch
      %21 = sbr.rel (%p19) target = $region8
    $region5: #{scaled_dot_product_attention_entmax15.1} parent=1 // loop_body
      %s23 = ssub.s32 %s18, 1
      %s24 = ssub.s32 %s18, 2
      %s31 = sadd.s32 1, %s26
      %p32 = scmp.ge.s32.totalorder %s31, 1
      %s33 = scalar_select %p32, 0, %s31
      %s34 = sadd.s32 1, %s25
      %s35 = scalar_select %p32, %s34, %s25
      %p36 = scmp.ge.s32.totalorder %s35, 4
      %s37 = scalar_select %p36, 0, %s35
      %s38 = ssub.s32 %s25, %s37
      %s39 = ssub.s32 %s26, %s33
      %s40 = sor.u32 %s38, %s39
      %p41 = scmp.eq.s32.totalorder %s40, 0
      %s43 = sadd.s32 %s42, 1
      %s44 = scalar_select %p41, %s42, %s43
      %p47 = pneg %p41
      %p48 = scmp.eq.s32.totalorder %s18, 3
      %p49 = por %p47, %p48
      %p50 = scmp.ne.s32.totalorder %s42, %s45
      %p51 = scmp.eq.s32.totalorder %s18, 0
      %p52 = por %p50, %p51
      %p53 = scmp.ne.s32.totalorder %s42, %s45
      %p54 = scmp.eq.s32.totalorder %s23, 3
      %p55 = por %p53, %p54
      %p56 = scmp.ne.s32.totalorder %s45, %s46
      %p57 = scmp.eq.s32.totalorder %s23, 0
      %p58 = por %p56, %p57
      %p59 = scmp.ne.s32.totalorder %s45, %s46
      %p60 = scmp.eq.s32.totalorder %s24, 3
      %p61 = por %p59, %p60
      %p63 = scmp.ne.s32.totalorder %s46, %s62
      %p64 = scmp.eq.s32.totalorder %s24, 0
      %p65 = por %p63, %p64
      %s66 = ssub.s32 %s25, %s37
      %p67 = scmp.eq.s32.totalorder %s66, 0
      %s69 = sadd.s32 %s68, 1
      %s70 = scalar_select %p67, %s68, %s69
      %p73 = pneg %p67
      %p74 = scmp.eq.s32.totalorder %s18, 3
      %p75 = por %p73, %p74
      %p76 = scmp.ne.s32.totalorder %s68, %s71
      %p77 = scmp.eq.s32.totalorder %s18, 0
      %p78 = por %p76, %p77
      %p79 = scmp.ne.s32.totalorder %s68, %s71
      %p80 = scmp.eq.s32.totalorder %s23, 3
      %p81 = por %p79, %p80
      %p82 = scmp.ne.s32.totalorder %s71, %s72
      %p83 = scmp.eq.s32.totalorder %s23, 0
      %p84 = por %p82, %p83
      %p85 = scmp.ne.s32.totalorder %s71, %s72
      %p86 = scmp.eq.s32.totalorder %s24, 3
      %p87 = por %p85, %p86
      %p89 = scmp.ne.s32.totalorder %s72, %s88
      %p90 = scmp.eq.s32.totalorder %s24, 0
      %p91 = por %p89, %p90
      %s92 = ssub.s32 %s25, %s37
      %p93 = scmp.eq.s32.totalorder %s92, 0
      %s95 = sadd.s32 %s94, 1
      %s96 = scalar_select %p93, %s94, %s95
      %p99 = pneg %p93
      %p100 = scmp.eq.s32.totalorder %s18, 3
      %p101 = por %p99, %p100
      %p102 = scmp.ne.s32.totalorder %s94, %s97
      %p103 = scmp.eq.s32.totalorder %s18, 0
      %p104 = por %p102, %p103
      %p105 = scmp.ne.s32.totalorder %s94, %s97
      %p106 = scmp.eq.s32.totalorder %s23, 3
      %p107 = por %p105, %p106
      %p108 = scmp.ne.s32.totalorder %s97, %s98
      %p109 = scmp.eq.s32.totalorder %s23, 0
      %p110 = por %p108, %p109
      %p111 = scmp.ne.s32.totalorder %s97, %s98
      %p112 = scmp.eq.s32.totalorder %s24, 3
      %p113 = por %p111, %p112
      %p115 = scmp.ne.s32.totalorder %s98, %s114
      %p116 = scmp.eq.s32.totalorder %s24, 0
      %p117 = por %p115, %p116
      %s118 = ssub.s32 %s25, %s37
      %s119 = ssub.s32 %s26, %s33
      %s120 = sor.u32 %s118, %s119
      %p121 = scmp.eq.s32.totalorder %s120, 0
      %s123 = sadd.s32 %s122, 1
      %s124 = scalar_select %p121, %s122, %s123
      %p127 = pneg %p121
      %p128 = scmp.eq.s32.totalorder %s18, 3
      %p129 = por %p127, %p128
      %p130 = scmp.ne.s32.totalorder %s122, %s125
      %p131 = scmp.eq.s32.totalorder %s18, 0
      %p132 = por %p130, %p131
      %p133 = scmp.ne.s32.totalorder %s122, %s125
      %p134 = scmp.eq.s32.totalorder %s23, 3
      %p135 = por %p133, %p134
      %p136 = scmp.ne.s32.totalorder %s125, %s126
      %p137 = scmp.eq.s32.totalorder %s23, 0
      %p138 = por %p136, %p137
      %p139 = scmp.ne.s32.totalorder %s125, %s126
      %p140 = scmp.eq.s32.totalorder %s24, 3
      %p141 = por %p139, %p140
      %p143 = scmp.ne.s32.totalorder %s126, %s142
      %p144 = scmp.eq.s32.totalorder %s24, 0
      %p145 = por %p143, %p144
      %p146 = scmp.le.s32.totalorder 1, %s18
      %p147 = scmp.lt.s32.totalorder %s18, 5
      %p148 = pnand %p146, %p147
      %p149 = pneg %p148
      // Predicated region
      $region9: #{scaled_dot_product_attention_entmax15.1} parent=5 // pred_check
        _
      $region10: #{scaled_dot_product_attention_entmax15.1} parent=5 // pred_check_branch
        %151 = sbr.rel (%p148) target = $region12
      $region11: #{scaled_dot_product_attention_entmax15.1} parent=5 // pred_region
        %s152 = ssub.s32 %s18, 1
      $region12: #{scaled_dot_product_attention_entmax15.1} parent=5 // pred_fallthru
        _
      %p153 = scmp.lt.s32.totalorder %s18, 4
      // Predicated region
      $region13: #{scaled_dot_product_attention_entmax15.1} parent=5 // pred_check
        %p154 = pneg %p153
      $region14: #{scaled_dot_product_attention_entmax15.1} parent=5 // pred_check_branch
        %156 = sbr.rel (%p154) target = $region16
      $region15: #{scaled_dot_product_attention_entmax15.1} parent=5 // pred_region
        // Predicated region
        $region17: #{scaled_dot_product_attention_entmax15.1} parent=15 // pred_check
          %p157 = pneg %p52
        $region18: #{scaled_dot_product_attention_entmax15.1} parent=15 // pred_check_branch
          %159 = sbr.rel (%p157) target = $region20
        $region19: #{scaled_dot_product_attention_entmax15.1} parent=15 // pred_region
          %s160 = sand.u32 %s42, 1
          %s161 = scalar_lea.sflag [#allocation3], %s160
          %s162 = sand.u32 %s42, 1
          %s163 = smul.addr %s162, 16
          %s164 = scalar_lea.vmem [#allocation2], %s163
          %s165 = smul.u32 2, %s26
          %s167 = ssub.s32 256, 256
          %168 = vsyncadd %s161, %s167
          %s169 = smul.addr %s25, 2
          %s170 = sadd.s32 %s165, %s169
          %s171 = smul.addr %s170, 128
          %s172 = scalar_lea.hbm %s0, %s171
          %s173 = sshll.u32 %s164, 4
          %s174 = int_to_ptr.vmem [resolvable:$true] %s173
          %179 = dma.hbm_to_vmem [thread:$0]  %s172, 256, %s174, %s161, 128, 128, 8
        $region20: #{scaled_dot_product_attention_entmax15.1} parent=15 // pred_fallthru
          _
        // Predicated region
        $region21: #{scaled_dot_product_attention_entmax15.1} parent=15 // pred_check
          %p180 = pneg %p78
        $region22: #{scaled_dot_product_attention_entmax15.1} parent=15 // pred_check_branch
          %182 = sbr.rel (%p180) target = $region24
        $region23: #{scaled_dot_product_attention_entmax15.1} parent=15 // pred_region
          %s183 = sand.u32 %s18, 1
          %s184 = scalar_lea.sflag [#allocation6], %s183
          %s185 = sand.u32 %s68, 1
          %s186 = smul.addr %s185, 16
          %s187 = scalar_lea.vmem [#allocation5], %s186
          %s189 = ssub.s32 256, 256
          %190 = vsyncadd %s184, %s189
          %s191 = smul.addr %s25, 2
          %s192 = smul.addr %s191, 128
          %s193 = scalar_lea.hbm %s1, %s192
          %s194 = sshll.u32 %s187, 4
          %s195 = int_to_ptr.vmem [resolvable:$true] %s194
          %200 = dma.hbm_to_vmem [thread:$0]  %s193, 256, %s195, %s184, 128, 128, 8
        $region24: #{scaled_dot_product_attention_entmax15.1} parent=15 // pred_fallthru
          _
        // Predicated region
        $region25: #{scaled_dot_product_attention_entmax15.1} parent=15 // pred_check
          %p201 = pneg %p104
        $region26: #{scaled_dot_product_attention_entmax15.1} parent=15 // pred_check_branch
          %203 = sbr.rel (%p201) target = $region28
        $region27: #{scaled_dot_product_attention_entmax15.1} parent=15 // pred_region
          %s204 = sand.u32 %s18, 1
          %s205 = scalar_lea.sflag [#allocation6], %s204
          %s206 = sand.u32 %s94, 1
          %s207 = smul.addr %s206, 16
          %s208 = scalar_lea.vmem [#allocation7], %s207
          %s210 = ssub.s32 256, 256
          %211 = vsyncadd %s205, %s210
          %s212 = smul.addr %s25, 2
          %s213 = smul.addr %s212, 128
          %s214 = scalar_lea.hbm %s2, %s213
          %s215 = sshll.u32 %s208, 4
          %s216 = int_to_ptr.vmem [resolvable:$true] %s215
          %221 = dma.hbm_to_vmem [thread:$0]  %s214, 256, %s216, %s205, 128, 128, 8
        $region28: #{scaled_dot_product_attention_entmax15.1} parent=15 // pred_fallthru
          _
      $region16: #{scaled_dot_product_attention_entmax15.1} parent=5 // pred_fallthru
        _
      %p222 = scmp.le.s32.totalorder 1, %s18
      %p223 = scmp.lt.s32.totalorder %s18, 5
      %p224 = pnand %p222, %p223
      %p225 = pneg %p224
      // Predicated region
      $region29: #{scaled_dot_product_attention_entmax15.1} parent=5 // pred_check
        _
      $region30: #{scaled_dot_product_attention_entmax15.1} parent=5 // pred_check_branch
        %227 = sbr.rel (%p224) target = $region32
      $region31: #{scaled_dot_product_attention_entmax15.1} parent=5 // pred_region
        %s228 = ssub.s32 %s18, 1
        %s229 = sand.u32 %s45, 1
        %s230 = scalar_lea.sflag [#allocation3], %s229
        %s231 = sand.u32 %s45, 1
        %s232 = smul.addr %s231, 16
        %s233 = scalar_lea.vmem [#allocation2], %s232
        // Predicated region
        $region33: #{scaled_dot_product_attention_entmax15.1} parent=31 // pred_check
          %p234 = pneg %p58
        $region34: #{scaled_dot_product_attention_entmax15.1} parent=31 // pred_check_branch
          %236 = sbr.rel (%p234) target = $region36
        $region35: #{scaled_dot_product_attention_entmax15.1} parent=31 // pred_region
          %237 = dma.done %s230, 256
        $region36: #{scaled_dot_product_attention_entmax15.1} parent=31 // pred_fallthru
          _
        %s238 = sand.u32 %s23, 1
        %s239 = scalar_lea.sflag [#allocation6], %s238
        %s240 = sand.u32 %s71, 1
        %s241 = smul.addr %s240, 16
        %s242 = scalar_lea.vmem [#allocation5], %s241
        // Predicated region
        $region37: #{scaled_dot_product_attention_entmax15.1} parent=31 // pred_check
          %p243 = pneg %p84
        $region38: #{scaled_dot_product_attention_entmax15.1} parent=31 // pred_check_branch
          %245 = sbr.rel (%p243) target = $region40
        $region39: #{scaled_dot_product_attention_entmax15.1} parent=31 // pred_region
          %246 = dma.done %s239, 256
        $region40: #{scaled_dot_product_attention_entmax15.1} parent=31 // pred_fallthru
          _
        %s247 = sand.u32 %s23, 1
        %s248 = scalar_lea.sflag [#allocation6], %s247
        %s249 = sand.u32 %s97, 1
        %s250 = smul.addr %s249, 16
        %s251 = scalar_lea.vmem [#allocation7], %s250
        // Predicated region
        $region41: #{scaled_dot_product_attention_entmax15.1} parent=31 // pred_check
          %p252 = pneg %p110
        $region42: #{scaled_dot_product_attention_entmax15.1} parent=31 // pred_check_branch
          %254 = sbr.rel (%p252) target = $region44
        $region43: #{scaled_dot_product_attention_entmax15.1} parent=31 // pred_region
          %255 = dma.done %s248, 256
        $region44: #{scaled_dot_product_attention_entmax15.1} parent=31 // pred_fallthru
          _
        %s256 = sand.u32 %s45, 1
        %s257 = scalar_lea.sflag [#allocation3], %s256
        %s258 = sand.u32 %s45, 1
        %s259 = smul.addr %s258, 16
        %s260 = scalar_lea.vmem [#allocation2], %s259
        %p261 = pneg %p58
        %p262 = pneg %p55
        %s263 = sand.u32 %s23, 1
        %s264 = scalar_lea.sflag [#allocation6], %s263
        %s265 = sand.u32 %s71, 1
        %s266 = smul.addr %s265, 16
        %s267 = scalar_lea.vmem [#allocation5], %s266
        %p268 = pneg %p84
        %p269 = pneg %p81
        %s270 = sand.u32 %s23, 1
        %s271 = scalar_lea.sflag [#allocation6], %s270
        %s272 = sand.u32 %s97, 1
        %s273 = smul.addr %s272, 16
        %s274 = scalar_lea.vmem [#allocation7], %s273
        %p275 = pneg %p110
        %p276 = pneg %p107
        %p277 = pneg %p138
        %p278 = pneg %p135
        %s279 = sand.u32 %s125, 1
        %s280 = scalar_lea.sflag [#allocation4], %s279
        %s281 = sand.u32 %s125, 1
        %s282 = smul.addr %s281, 16
        %s283 = scalar_lea.vmem [#allocation8], %s282
        %s284 = smul.u32 2, %s28
        %s285 = smul.u32 2, %s28
        %v286 = vld [vmem:[%s233] sm:$0xff]
        %v287 = vld [vmem:[%s233 + $0x8] sm:$0xff]
        %v288 = vld [vmem:[%s242] sm:$0xff]
        %v289 = vld [vmem:[%s242 + $0x8] sm:$0xff]
        %v290 = vld [vmem:[%s251] sm:$0xff]
        %v291 = vld [vmem:[%s251 + $0x8] sm:$0xff]
        %vm292 = vcmask 261120
        %v294 = vsel %vm292, %v286, 0
        %v297 = vsel %vm292, %v287, 0
        %v300 = vsel %vm292, %v288, 0
        %v303 = vsel %vm292, %v289, 0
        %305 = vmatprep.subr.mxu0 0.0
        %306 = vmatpush1.xpose.msra.mxu0 0.0
        %307 = vmatprep.subr.mxu0 0.0
        %308 = vmatpush1.xpose.msra.mxu0 0.0
        %309 = vmatprep.subr.mxu0 0.0
        %310 = vmatpush1.xpose.msra.mxu0 0.0
        %311 = vmatprep.subr.mxu0 0.0
        %312 = vmatpush1.xpose.msra.mxu0 0.0
        %313 = vmatprep.subr.mxu0 0.0
        %314 = vmatpush1.xpose.msra.mxu0 0.0
        %315 = vmatprep.subr.mxu0 0.0
        %316 = vmatpush1.xpose.msra.mxu0 0.0
        %317 = vmatprep.subr.mxu0 0.0
        %318 = vmatpush1.xpose.msra.mxu0 0.0
        %319 = vmatprep.subr.mxu0 0.0
        %320 = vmatpush1.xpose.msra.mxu0 0.0
        %321 = vmatprep.subr.mxu0 0.0
        %322 = vmatpush1.xpose.msra.mxu0 0.0
        %323 = vmatprep.subr.mxu0 0.0
        %324 = vmatpush1.xpose.msra.mxu0 0.0
        %325 = vmatprep.subr.mxu0 0.0
        %326 = vmatpush1.xpose.msra.mxu0 0.0
        %327 = vmatprep.subr.mxu0 0.0
        %328 = vmatpush1.xpose.msra.mxu0 0.0
        %329 = vmatprep.subr.mxu0 0.0
        %330 = vmatpush1.xpose.msra.mxu0 0.0
        %331 = vmatprep.subr.mxu0 0.0
        %332 = vmatpush1.xpose.msra.mxu0 0.0
        %333 = vmatprep.subr.mxu0 0.0
        %334 = vmatpush1.xpose.msra.mxu0 %v303
        %335 = vmatprep.subr.mxu0 0.0
        %336 = vmatpush1.xpose.msra.mxu0 %v300
        %337 = vmatprep.subr.mxu0 0.0
        %338 = vmatpush2.xpose.msra.mxu0 0.0
        %339 = vmatprep.subr.mxu0 0.0
        %340 = vmatpush2.xpose.msra.mxu0 0.0
        %341 = vmatprep.subr.mxu0 0.0
        %342 = vmatpush2.xpose.msra.mxu0 0.0
        %343 = vmatprep.subr.mxu0 0.0
        %344 = vmatpush2.xpose.msra.mxu0 0.0
        %345 = vmatprep.subr.mxu0 0.0
        %346 = vmatpush2.xpose.msra.mxu0 0.0
        %347 = vmatprep.subr.mxu0 0.0
        %348 = vmatpush2.xpose.msra.mxu0 0.0
        %349 = vmatprep.subr.mxu0 0.0
        %350 = vmatpush2.xpose.msra.mxu0 0.0
        %351 = vmatprep.subr.mxu0 0.0
        %352 = vmatpush2.xpose.msra.mxu0 0.0
        %353 = vmatprep.subr.mxu0 0.0
        %354 = vmatpush2.xpose.msra.mxu0 0.0
        %355 = vmatprep.subr.mxu0 0.0
        %356 = vmatpush2.xpose.msra.mxu0 0.0
        %357 = vmatprep.subr.mxu0 0.0
        %358 = vmatpush2.xpose.msra.mxu0 0.0
        %359 = vmatprep.subr.mxu0 0.0
        %360 = vmatpush2.xpose.msra.mxu0 0.0
        %361 = vmatprep.subr.mxu0 0.0
        %362 = vmatpush2.xpose.msra.mxu0 0.0
        %363 = vmatprep.subr.mxu0 0.0
        %364 = vmatpush2.xpose.msra.mxu0 0.0
        %365 = vmatprep.subr.mxu0 0.0
        %366 = vmatpush2.xpose.msra.mxu0 0.0
        %367 = vmatprep.subr.mxu0 0.0
        %368 = vmatpush2.xpose.msra.mxu0 0.0
        %369 = vmatprep.mubr.f32.mxu0 0.0
        %370 = vmatmul.mubr.f32.gmra.mxu0 %v294
        %v371 = vpop.f32.mrf.mxu0
        %v372 = vadd.f32 0.0, %v371
        %v373 = vpop.f32.mrf.mxu0
        %374 = vmatprep.mubr.f32.mxu0 0.0
        %375 = vmatmul.mubr.f32.gmra.mxu0 %v297
        %v376 = vpop.f32.mrf.mxu0
        %v377 = vadd.f32 0.0, %v376
        %v378 = vpop.f32.mrf.mxu0
        %379 = vdwg.mxu0
        %v380 = vmul.f32 %v372, 0.088388346
        %v381 = vmul.f32 %v377, 0.088388346
        %vm382 = vcmask 130048
        %v383 = vsel %vm382, %v380, -inf
        %384 = vmax.xlane.f32.xlu0 %v383
        %v385 = vpop.xlane.xlu0 %384
        %v386 = vsel %vm382, %v381, -inf
        %387 = vmax.xlane.f32.xlu0 %v386
        %v388 = vpop.xlane.xlu0 %387
        %v389 = vsub.f32 %v385, 1.0
        %v390 = vsub.f32 %v388, 1.0
        loop: start=0, step=1, limit=20
        $region45: #{scaled_dot_product_attention_entmax15.1} parent=31 // loop_pre_header
          _
        $region46: #{scaled_dot_product_attention_entmax15.1} parent=31 // loop_header
          %s392 = sphi 0, %s396
          %p393 = scmp.ge.s32.totalorder %s392, 20
          %v397 = vphi %v389, %v418
          %v398 = vphi %v390, %v419
          %s399 = sphi 0.75, %s400
        $region47: #{scaled_dot_product_attention_entmax15.1} parent=31 // loop_header_branch
          %395 = sbr.rel (%p393) target = $region51
        $region48: #{scaled_dot_product_attention_entmax15.1} parent=31 // loop_body
          %s400 = smul.f32 %s399, 0.5
          %v401 = vstv %s400
          %v402 = vadd.f32 %v397, %v401
          %v403 = vadd.f32 %v398, %v401
          %v404 = vsub.f32 %v380, %v402
          %v405 = vsub.f32 %v381, %v403
          %v406 = vmax.f32 %v404, 0.0
          %v407 = vmax.f32 %v405, 0.0
          %v408 = vmul.f32 %v406, %v406
          %v409 = vmul.f32 %v407, %v407
          %v410 = vsel %vm382, %v408, 0.0
          %411 = vadd.xlane.f32.xlu0 %v410
          %v412 = vpop.xlane.xlu0 %411
          %v413 = vsel %vm382, %v409, 0.0
          %414 = vadd.xlane.f32.xlu0 %v413
          %v415 = vpop.xlane.xlu0 %414
          %vm416 = vcmp.ge.f32.partialorder %v412, 1.0
          %vm417 = vcmp.ge.f32.partialorder %v415, 1.0
          %v418 = vsel %vm416, %v402, %v397
          %v419 = vsel %vm417, %v403, %v398
        $region49: #{scaled_dot_product_attention_entmax15.1} parent=31 // loop_footer
          %s396 = sadd.s32 1, %s392
        $region50: #{scaled_dot_product_attention_entmax15.1} parent=31 // loop_footer_branch
          %391 = sbr.rel target = $region46
        $region51: #{scaled_dot_product_attention_entmax15.1} parent=31 // loop_exit
          _
        %s420 = smul.f32 %s399, 0.5
        %v421 = vstv %s420
        %v422 = vadd.f32 %v397, %v421
        %v423 = vadd.f32 %v398, %v421
        %v424 = vsub.f32 %v380, %v422
        %v425 = vsub.f32 %v381, %v423
        %v426 = vmax.f32 %v424, 0.0
        %v427 = vmax.f32 %v425, 0.0
        %v428 = vmul.f32 %v426, %v426
        %v429 = vmul.f32 %v427, %v427
        %v430 = vsel %vm382, %v428, 0.0
        %431 = vadd.xlane.f32.xlu0 %v430
        %v432 = vpop.xlane.xlu0 %431
        %v433 = vsel %vm382, %v429, 0.0
        %434 = vadd.xlane.f32.xlu0 %v433
        %v435 = vpop.xlane.xlu0 %434
        %v436 = vrcp.pop %v432
        %v437 = vrcp.pop %v435
        %v438 = vmul.f32 %v432, %v436
        %v439 = vmul.f32 %v435, %v437
        %v440 = vsub.f32 2.0, %v438
        %v441 = vsub.f32 2.0, %v439
        %v442 = vmul.f32 %v436, %v440
        %v443 = vmul.f32 %v437, %v441
        %v445 = vsel %vm382, %v428, 0
        %v448 = vsel %vm382, %v429, 0
        %450 = vmatprep.subr.mxu0 0.0
        %451 = vmatpush1.msra.mxu0 0.0
        %452 = vmatprep.subr.mxu0 0.0
        %453 = vmatpush1.msra.mxu0 0.0
        %454 = vmatprep.subr.mxu0 0.0
        %455 = vmatpush1.msra.mxu0 0.0
        %456 = vmatprep.subr.mxu0 0.0
        %457 = vmatpush1.msra.mxu0 0.0
        %458 = vmatprep.subr.mxu0 0.0
        %459 = vmatpush1.msra.mxu0 0.0
        %460 = vmatprep.subr.mxu0 0.0
        %461 = vmatpush1.msra.mxu0 0.0
        %462 = vmatprep.subr.mxu0 0.0
        %463 = vmatpush1.msra.mxu0 0.0
        %464 = vmatprep.subr.mxu0 0.0
        %465 = vmatpush1.msra.mxu0 0.0
        %466 = vmatprep.subr.mxu0 0.0
        %467 = vmatpush1.msra.mxu0 0.0
        %468 = vmatprep.subr.mxu0 0.0
        %469 = vmatpush1.msra.mxu0 0.0
        %470 = vmatprep.subr.mxu0 0.0
        %471 = vmatpush1.msra.mxu0 0.0
        %472 = vmatprep.subr.mxu0 0.0
        %473 = vmatpush1.msra.mxu0 0.0
        %474 = vmatprep.subr.mxu0 0.0
        %475 = vmatpush1.msra.mxu0 0.0
        %476 = vmatprep.subr.mxu0 0.0
        %477 = vmatpush1.msra.mxu0 0.0
        %478 = vmatprep.subr.mxu0 0.0
        %479 = vmatpush1.msra.mxu0 %v291
        %480 = vmatprep.subr.mxu0 0.0
        %481 = vmatpush1.msra.mxu0 %v290
        %482 = vmatprep.subr.mxu0 0.0
        %483 = vmatpush2.msra.mxu0 0.0
        %484 = vmatprep.subr.mxu0 0.0
        %485 = vmatpush2.msra.mxu0 0.0
        %486 = vmatprep.subr.mxu0 0.0
        %487 = vmatpush2.msra.mxu0 0.0
        %488 = vmatprep.subr.mxu0 0.0
        %489 = vmatpush2.msra.mxu0 0.0
        %490 = vmatprep.subr.mxu0 0.0
        %491 = vmatpush2.msra.mxu0 0.0
        %492 = vmatprep.subr.mxu0 0.0
        %493 = vmatpush2.msra.mxu0 0.0
        %494 = vmatprep.subr.mxu0 0.0
        %495 = vmatpush2.msra.mxu0 0.0
        %496 = vmatprep.subr.mxu0 0.0
        %497 = vmatpush2.msra.mxu0 0.0
        %498 = vmatprep.subr.mxu0 0.0
        %499 = vmatpush2.msra.mxu0 0.0
        %500 = vmatprep.subr.mxu0 0.0
        %501 = vmatpush2.msra.mxu0 0.0
        %502 = vmatprep.subr.mxu0 0.0
        %503 = vmatpush2.msra.mxu0 0.0
        %504 = vmatprep.subr.mxu0 0.0
        %505 = vmatpush2.msra.mxu0 0.0
        %506 = vmatprep.subr.mxu0 0.0
        %507 = vmatpush2.msra.mxu0 0.0
        %508 = vmatprep.subr.mxu0 0.0
        %509 = vmatpush2.msra.mxu0 0.0
        %510 = vmatprep.subr.mxu0 0.0
        %511 = vmatpush2.msra.mxu0 0.0
        %512 = vmatprep.subr.mxu0 0.0
        %513 = vmatpush2.msra.mxu0 0.0
        %514 = vmatprep.mubr.f32.mxu0 0.0
        %515 = vmatmul.mubr.f32.gmra.mxu0 %v445
        %v516 = vpop.f32.mrf.mxu0
        %v517 = vadd.f32 0.0, %v516
        %v518 = vpop.f32.mrf.mxu0
        %519 = vmatprep.mubr.f32.mxu0 0.0
        %520 = vmatmul.mubr.f32.gmra.mxu0 %v448
        %v521 = vpop.f32.mrf.mxu0
        %v522 = vadd.f32 0.0, %v521
        %v523 = vpop.f32.mrf.mxu0
        %524 = vdwg.mxu0
        %v525 = vmul.f32 %v517, %v442
        %v526 = vmul.f32 %v522, %v443
        %527 = vst.msk [vmem:[%s283] sm:$0xff] %vm292, %v525
        %528 = vst.msk [vmem:[%s283 + $0x8] sm:$0xff] %vm292, %v526
        %s529 = sand.u32 %s125, 1
        %s530 = scalar_lea.sflag [#allocation4], %s529
        %s531 = sand.u32 %s125, 1
        %s532 = smul.addr %s531, 16
        %s533 = scalar_lea.vmem [#allocation8], %s532
        // Predicated region
        $region52: #{scaled_dot_product_attention_entmax15.1} parent=31 // pred_check
          %p534 = pneg %p135
        $region53: #{scaled_dot_product_attention_entmax15.1} parent=31 // pred_check_branch
          %536 = sbr.rel (%p534) target = $region55
        $region54: #{scaled_dot_product_attention_entmax15.1} parent=31 // pred_region
          %s537 = smul.u32 2, %s28
          %s539 = ssub.s32 256, 256
          %540 = vsyncadd %s530, %s539
          %s541 = smul.addr %s27, 2
          %s542 = sadd.s32 %s537, %s541
          %s543 = smul.addr %s542, 128
          %s544 = scalar_lea.hbm %s3, %s543
          %s545 = sshll.u32 %s533, 4
          %s546 = int_to_ptr.vmem [resolvable:$true] %s545
          %551 = dma.vmem_to_hbm [thread:$0]  %s546, 256, %s544, %s530, 128, 128, 8
        $region55: #{scaled_dot_product_attention_entmax15.1} parent=31 // pred_fallthru
          _
      $region32: #{scaled_dot_product_attention_entmax15.1} parent=5 // pred_fallthru
        _
      %p552 = scmp.le.s32.totalorder 2, %s18
      // Predicated region
      $region56: #{scaled_dot_product_attention_entmax15.1} parent=5 // pred_check
        %p553 = pneg %p552
      $region57: #{scaled_dot_product_attention_entmax15.1} parent=5 // pred_check_branch
        %555 = sbr.rel (%p553) target = $region59
      $region58: #{scaled_dot_product_attention_entmax15.1} parent=5 // pred_region
        %s556 = ssub.s32 %s18, 2
        // Predicated region
        $region60: #{scaled_dot_product_attention_entmax15.1} parent=58 // pred_check
          %p557 = pneg %p141
        $region61: #{scaled_dot_product_attention_entmax15.1} parent=58 // pred_check_branch
          %559 = sbr.rel (%p557) target = $region63
        $region62: #{scaled_dot_product_attention_entmax15.1} parent=58 // pred_region
          %s560 = sand.u32 %s126, 1
          %s561 = scalar_lea.sflag [#allocation4], %s560
          %s562 = sand.u32 %s126, 1
          %s563 = smul.addr %s562, 16
          %s564 = scalar_lea.vmem [#allocation8], %s563
          %565 = dma.done %s561, 256
        $region63: #{scaled_dot_product_attention_entmax15.1} parent=58 // pred_fallthru
          _
      $region59: #{scaled_dot_product_attention_entmax15.1} parent=5 // pred_fallthru
        _
    $region6: #{scaled_dot_product_attention_entmax15.1} parent=1 // loop_footer
      %s22 = sadd.s32 1, %s18
    $region7: #{scaled_dot_product_attention_entmax15.1} parent=1 // loop_footer_branch
      %17 = sbr.rel target = $region3
    $region8: #{scaled_dot_product_attention_entmax15.1} parent=1 // loop_exit
      _
    %566 = vsyncpa [#allocation3], 1
    %s567 = scalar_lea.sflag [#allocation3], 1
    %568 = vsyncpa %s567, 1
    %569 = vsyncpa [#allocation6], 1
    %s570 = scalar_lea.sflag [#allocation6], 1
    %571 = vsyncpa %s570, 1
    %572 = vsyncpa [#allocation4], 1
    %s573 = scalar_lea.sflag [#allocation4], 1
    %574 = vsyncpa %s573, 1

</llo_original>
